<compile_context>
chip_gen: v7x
topology: tpu7x:2x2x1
jax: 0.10.0
libtpu: 0.0.40
codegen_flags: <defaults>
</compile_context>

<pallas_src>
import functools

import jax
import jax.numpy as jnp
import numpy as np
from jax.experimental import pallas as pl
from jax.experimental.pallas import tpu as pltpu


def _round_up(v, m):
    return (v + m - 1) // m * m


def _sparse_conv_kernel(cnt_ref, in_idx_ref, out_idx_ref,   # scalar-prefetch (SMEM)
                        x_ref, w_ref, b_ref,                # inputs (VMEM)
                        o_ref,                              # output (VMEM, resident over k)
                        xg_ref, xmat_ref,                   # scratch (VMEM)
                        *, max_rules):
    k = pl.program_id(1)

    # Zero the resident accumulator at the first kernel offset.
    @pl.when(k == 0)
    def _init():
        o_ref[...] = jnp.zeros_like(o_ref)

    cnt = cnt_ref[k]

    # Skip empty kernel offsets entirely (no gather / matmul / scatter).
    @pl.when(cnt > 0)
    def _body():
        base = k * max_rules

        # Gather:  xg[i, :] = x[in_idx[i], :]   for i < cnt
        def _gather(i, carry):
            src = in_idx_ref[base + i]
            xg_ref[pl.ds(i, 1), :] = x_ref[pl.ds(src, 1), :]
            return carry

        jax.lax.fori_loop(0, cnt, _gather, 0)

        # Channel matmul for this offset. Rows >= cnt hold stale data but are
        # never scattered, so their values are harmless.
        xmat_ref[...] = jnp.dot(xg_ref[...], w_ref[0],
                                preferred_element_type=jnp.float32)

        # Scatter-add:  out[out_idx[i], :] += xmat[i, :]   for i < cnt.
        # Sequential loop, so duplicate output indices accumulate correctly
        # (same semantics as torch index_add_).
        def _scatter(i, carry):
            dst = out_idx_ref[base + i]
            o_ref[pl.ds(dst, 1), :] = (o_ref[pl.ds(dst, 1), :]
                                       + xmat_ref[pl.ds(i, 1), :])
            return carry

        jax.lax.fori_loop(0, cnt, _scatter, 0)

    # Bias on the last kernel offset.
    @pl.when(k == pl.num_programs(1) - 1)
    def _finish():
        o_ref[...] = o_ref[...] + b_ref[...]


@functools.partial(jax.jit, static_argnames=("n_out",))
def sparse_conv3d_forward(x_data, weights, bias, counts,
                          in_inds_pad, out_inds_pad, n_out):
    """x_data: (N_in, Cin) f32; weights: (K, Cin, Cout) f32; bias: (Cout,) f32
    counts: (K,) int32 number of active rules per kernel offset
    in_inds_pad / out_inds_pad: (K, M) int32; only the first counts[k] entries
    of row k are used (padding is -1 and never read)."""
    k_total, cin, cout = weights.shape
    n_in = x_data.shape[0]
    m = in_inds_pad.shape[1]

    # --- pad to TPU-friendly shapes: lane dims -> x128, sublane dims -> x8 ---
    cin_p = _round_up(cin, 128)
    cout_p = _round_up(cout, 128)
    n_in_p = _round_up(n_in, 8)
    n_out_p = _round_up(n_out, 8)
    m_p = _round_up(m, 8)

    x_p = jnp.zeros((n_in_p, cin_p), jnp.float32).at[:n_in, :cin].set(x_data)
    w_p = jnp.zeros((k_total, cin_p, cout_p), jnp.float32).at[:, :cin, :cout].set(weights)
    b_p = jnp.zeros((1, cout_p), jnp.float32).at[0, :cout].set(bias)

    # Rulebook indices, flattened to 1-D for a compact SMEM layout.
    in_flat = jnp.pad(in_inds_pad.astype(jnp.int32), ((0, 0), (0, m_p - m)),
                      constant_values=-1).reshape(-1)
    out_flat = jnp.pad(out_inds_pad.astype(jnp.int32), ((0, 0), (0, m_p - m)),
                       constant_values=-1).reshape(-1)
    counts = counts.astype(jnp.int32)

    # Output-channel tiling: a "parallel" grid axis (megacore on v7x) that also
    # bounds per-step VMEM for large Cout.
    cout_tile = 256 if cout_p % 256 == 0 else 128
    n_ct = cout_p // cout_tile

    grid_spec = pltpu.PrefetchScalarGridSpec(
        num_scalar_prefetch=3,
        grid=(n_ct, k_total),
        in_specs=[
            # x stays resident in VMEM across the whole grid.  For very large
            # N_in this would instead stay in HBM (pl.ANY) with row DMAs.
            pl.BlockSpec((n_in_p, cin_p), lambda j, k, cnt, ii, oi: (0, 0)),
            pl.BlockSpec((1, cin_p, cout_tile), lambda j, k, cnt, ii, oi: (k, 0, j)),
            pl.BlockSpec((1, cout_tile), lambda j, k, cnt, ii, oi: (0, j)),
        ],
        out_specs=pl.BlockSpec((n_out_p, cout_tile),
                               lambda j, k, cnt, ii, oi: (0, j)),
        scratch_shapes=[
            pltpu.VMEM((m_p, cin_p), jnp.float32),      # gathered input rows
            pltpu.VMEM((m_p, cout_tile), jnp.float32),  # per-offset matmul result
        ],
    )

    out_p = pl.pallas_call(
        functools.partial(_sparse_conv_kernel, max_rules=m_p),
        out_shape=jax.ShapeDtypeStruct((n_out_p, cout_p), jnp.float32),
        grid_spec=grid_spec,
        compiler_params=pltpu.CompilerParams(
            dimension_semantics=("parallel", "arbitrary"),
            vmem_limit_bytes=32 * 1024 * 1024,
        ),
    )(counts, in_flat, out_flat, x_p, w_p, b_p)

    return out_p[:n_out, :cout]


def reference_forward(x_data, weights, bias, in_inds_pad, out_inds_pad, n_out):
    """Pure-JAX reference that mimics the PyTorch loop exactly."""
    k_total, _, cout = weights.shape
    out = jnp.zeros((n_out, cout), jnp.float32)
    for k in range(k_total):
        ii = in_inds_pad[k]
        oi = out_inds_pad[k]
        valid = (oi >= 0).astype(jnp.float32)[:, None]
        gathered = x_data[jnp.clip(ii, 0, x_data.shape[0] - 1)]
        contrib = (gathered @ weights[k]) * valid
        out = out.at[jnp.clip(oi, 0, n_out - 1)].add(contrib)
    return out + bias[None, :]


if __name__ == "__main__":
    # ---- problem sizes (small, synthetic) ----
    kernel_size = 2
    K = kernel_size ** 3            # 8 kernel offsets
    in_features = 8
    out_features = 16
    n_in_points = 24                # len(in_rep)
    n_out_points = 20               # len(out_rep.d_indices)
    max_rules = 16                  # per-offset rule padding M

    key = jax.random.PRNGKey(0)
    k_x, k_w, k_cnt, k_in, k_out = jax.random.split(key, 5)

    # ---- deterministic parameter init (kaiming_normal_, fan_out, relu) ----
    fan_out = K * out_features      # torch fan_out for a (K, Cin, Cout) tensor
    std = float(np.sqrt(2.0) / np.sqrt(fan_out))
    weights = std * jax.random.normal(k_w, (K, in_features, out_features), jnp.float32)
    bias = jnp.zeros((out_features,), jnp.float32)

    # ---- synthetic sparse input + rulebook ----
    x_data = jax.random.normal(k_x, (n_in_points, in_features), jnp.float32)

    counts = np.asarray(
        jax.random.randint(k_cnt, (K,), 0, max_rules + 1))   # some groups may be empty
    in_rules = np.asarray(
        jax.random.randint(k_in, (K, max_rules), 0, n_in_points), np.int32)
    out_rules = np.asarray(
        jax.random.randint(k_out, (K, max_rules), 0, n_out_points), np.int32)

    # pad inactive rules with -1 (never read by the kernel: loops stop at count)
    rule_slot = np.arange(max_rules)[None, :]
    active = rule_slot < counts[:, None]
    in_inds_pad = jnp.asarray(np.where(active, in_rules, -1), jnp.int32)
    out_inds_pad = jnp.asarray(np.where(active, out_rules, -1), jnp.int32)
    counts_j = jnp.asarray(counts, jnp.int32)

    # ---- run Pallas kernel ----
    out = sparse_conv3d_forward(x_data, weights, bias, counts_j,
                                in_inds_pad, out_inds_pad, n_out_points)
    out = jax.block_until_ready(out)

    # ---- check against pure-JAX reference ----
    ref = reference_forward(x_data, weights, bias,
                            in_inds_pad, out_inds_pad, n_out_points)
    # Tolerance accommodates possible differences between the in-kernel MXU
    # f32 matmul path and XLA's dot in the reference; structural bugs would be
    # O(1) errors, far above this.
    np.testing.assert_allclose(np.asarray(out), np.asarray(ref),
                               rtol=2e-2, atol=2e-2)
    print("KERNEL_OK")
</pallas_src>

<mosaic_0001>
module attributes {stable_mosaic.version = 11 : i64} {
  func.func @_sparse_conv_kernel(%arg0: i32, %arg1: i32, %arg2: memref<8xi32, #tpu.memory_space<smem>>, %arg3: memref<128xi32, #tpu.memory_space<smem>>, %arg4: memref<128xi32, #tpu.memory_space<smem>>, %arg5: memref<24x128xf32, #tpu.memory_space<vmem>>, %arg6: memref<1x128x128xf32, #tpu.memory_space<vmem>>, %arg7: memref<1x128xf32, #tpu.memory_space<vmem>>, %arg8: memref<24x128xf32, #tpu.memory_space<vmem>>, %arg9: memref<16x128xf32, #tpu.memory_space<vmem>>, %arg10: memref<16x128xf32, #tpu.memory_space<vmem>>) attributes {dimension_semantics = [#tpu.dimension_semantics<parallel>, #tpu.dimension_semantics<arbitrary>], iteration_bounds = array<i64: 1, 8>, scalar_prefetch = 3 : i64, scratch_operands = 2 : i64, tpu.core_type = #tpu.core_type<tc>, window_params = [{pipeline_mode = #tpu.pipeline_mode<synchronous>, transform_indices = @transform_0, window_bounds = array<i64: 24, 128>}, {transform_indices = @transform_1, window_bounds = array<i64: 1, 128, 128>}, {transform_indices = @transform_2, window_bounds = array<i64: 1, 128>}, {transform_indices = @transform_3, window_bounds = array<i64: 24, 128>}]} {
    %c0_i32 = arith.constant 0 : i32
    %0 = arith.cmpi eq, %arg1, %c0_i32 : i32
    %1 = arith.extui %0 : i1 to i32
    %c0_i32_0 = arith.constant 0 : i32
    %2 = arith.cmpi ne, %1, %c0_i32_0 : i32
    scf.if %2 {
      %cst = arith.constant 0.000000e+00 : f32
      %11 = vector.broadcast %cst : f32 to vector<24x128xf32>
      %c0 = arith.constant 0 : index
      %c0_4 = arith.constant 0 : index
      %12 = vector.load %arg8[%c0, %c0_4] : memref<24x128xf32, #tpu.memory_space<vmem>>, vector<24x128xf32>
      tpu.vector_store %arg8[%c0, %c0_4], %11 {strides = array<i32>} : memref<24x128xf32, #tpu.memory_space<vmem>>, vector<24x128xf32>,
    } else {
    }
    %3 = arith.index_cast %arg1 : i32 to index
    %4 = memref.load %arg2[%3] : memref<8xi32, #tpu.memory_space<smem>>
    %c0_i32_1 = arith.constant 0 : i32
    %5 = arith.cmpi sgt, %4, %c0_i32_1 : i32
    %6 = arith.extui %5 : i1 to i32
    %c0_i32_2 = arith.constant 0 : i32
    %7 = arith.cmpi ne, %6, %c0_i32_2 : i32
    scf.if %7 {
      %c16_i32 = arith.constant 16 : i32
      %11 = arith.muli %arg1, %c16_i32 : i32
      %c0_i32_4 = arith.constant 0 : i32
      %c0_i32_5 = arith.constant 0 : i32
      %12 = arith.subi %4, %c0_i32_5 : i32
      %13 = arith.addi %c0_i32_5, %12 : i32
      %c1_i32 = arith.constant 1 : i32
      scf.for %arg11 = %c0_i32_5 to %13 step %c1_i32  : i32 {
        %21 = arith.addi %11, %arg11 : i32
        %22 = arith.index_cast %21 : i32 to index
        %23 = memref.load %arg3[%22] : memref<128xi32, #tpu.memory_space<smem>>
        %24 = arith.index_cast %23 : i32 to index
        %c0_15 = arith.constant 0 : index
        %25 = vector.load %arg5[%24, %c0_15] : memref<24x128xf32, #tpu.memory_space<vmem>>, vector<1x128xf32>
        %26 = arith.index_cast %arg11 : i32 to index
        %c0_16 = arith.constant 0 : index
        %27 = vector.load %arg9[%26, %c0_16] : memref<16x128xf32, #tpu.memory_space<vmem>>, vector<1x128xf32>
        tpu.vector_store %arg9[%26, %c0_16], %25 {strides = array<i32>} : memref<16x128xf32, #tpu.memory_space<vmem>>, vector<1x128xf32>,
      }
      %c0 = arith.constant 0 : index
      %c0_6 = arith.constant 0 : index
      %14 = vector.load %arg9[%c0, %c0_6] : memref<16x128xf32, #tpu.memory_space<vmem>>, vector<16x128xf32>
      %c0_7 = arith.constant 0 : index
      %c0_8 = arith.constant 0 : index
      %c0_9 = arith.constant 0 : index
      %15 = vector.load %arg6[%c0_7, %c0_8, %c0_9] : memref<1x128x128xf32, #tpu.memory_space<vmem>>, vector<1x128x128xf32>
      %16 = vector.shape_cast %15 : vector<1x128x128xf32> to vector<128x128xf32>
      %cst = arith.constant dense<0.000000e+00> : vector<16x128xf32>
      %17 = tpu.matmul %14, %16, %cst {dimension_numbers = #tpu.dot_dimension_numbers<[1], [0], [0], [1], [0, 0, 1, 1], [], []>} : vector<16x128xf32>, vector<128x128xf32>, vector<16x128xf32> -> vector<16x128xf32>
      %c0_10 = arith.constant 0 : index
      %c0_11 = arith.constant 0 : index
      %18 = vector.load %arg10[%c0_10, %c0_11] : memref<16x128xf32, #tpu.memory_space<vmem>>, vector<16x128xf32>
      tpu.vector_store %arg10[%c0_10, %c0_11], %17 {strides = array<i32>} : memref<16x128xf32, #tpu.memory_space<vmem>>, vector<16x128xf32>,
      %c0_i32_12 = arith.constant 0 : i32
      %c0_i32_13 = arith.constant 0 : i32
      %19 = arith.subi %4, %c0_i32_13 : i32
      %20 = arith.addi %c0_i32_13, %19 : i32
      %c1_i32_14 = arith.constant 1 : i32
      scf.for %arg11 = %c0_i32_13 to %20 step %c1_i32_14  : i32 {
        %21 = arith.addi %11, %arg11 : i32
        %22 = arith.index_cast %21 : i32 to index
        %23 = memref.load %arg4[%22] : memref<128xi32, #tpu.memory_space<smem>>
        %24 = arith.index_cast %23 : i32 to index
        %c0_15 = arith.constant 0 : index
        %25 = vector.load %arg8[%24, %c0_15] : memref<24x128xf32, #tpu.memory_space<vmem>>, vector<1x128xf32>
        %26 = arith.index_cast %arg11 : i32 to index
        %c0_16 = arith.constant 0 : index
        %27 = vector.load %arg10[%26, %c0_16] : memref<16x128xf32, #tpu.memory_space<vmem>>, vector<1x128xf32>
        %28 = arith.addf %25, %27 : vector<1x128xf32>
        %29 = arith.index_cast %23 : i32 to index
        %c0_17 = arith.constant 0 : index
        %30 = vector.load %arg8[%29, %c0_17] : memref<24x128xf32, #tpu.memory_space<vmem>>, vector<1x128xf32>
        tpu.vector_store %arg8[%29, %c0_17], %28 {strides = array<i32>} : memref<24x128xf32, #tpu.memory_space<vmem>>, vector<1x128xf32>,
      }
    } else {
    }
    %c7_i32 = arith.constant 7 : i32
    %8 = arith.cmpi eq, %arg1, %c7_i32 : i32
    %9 = arith.extui %8 : i1 to i32
    %c0_i32_3 = arith.constant 0 : i32
    %10 = arith.cmpi ne, %9, %c0_i32_3 : i32
    scf.if %10 {
      %c0 = arith.constant 0 : index
      %c0_4 = arith.constant 0 : index
      %11 = vector.load %arg8[%c0, %c0_4] : memref<24x128xf32, #tpu.memory_space<vmem>>, vector<24x128xf32>
      %c0_5 = arith.constant 0 : index
      %c0_6 = arith.constant 0 : index
      %12 = vector.load %arg7[%c0_5, %c0_6] : memref<1x128xf32, #tpu.memory_space<vmem>>, vector<1x128xf32>
      %13 = vector.broadcast %12 : vector<1x128xf32> to vector<24x128xf32>
      %14 = arith.addf %11, %13 : vector<24x128xf32>
      %c0_7 = arith.constant 0 : index
      %c0_8 = arith.constant 0 : index
      %15 = vector.load %arg8[%c0_7, %c0_8] : memref<24x128xf32, #tpu.memory_space<vmem>>, vector<24x128xf32>
      tpu.vector_store %arg8[%c0_7, %c0_8], %14 {strides = array<i32>} : memref<24x128xf32, #tpu.memory_space<vmem>>, vector<24x128xf32>,
    } else {
    }
    return
  }
  func.func @transform_0(%arg0: i32, %arg1: i32, %arg2: memref<8xi32, #tpu.memory_space<smem>>, %arg3: memref<128xi32, #tpu.memory_space<smem>>, %arg4: memref<128xi32, #tpu.memory_space<smem>>) -> (i32, i32) {
    %c0_i32 = arith.constant 0 : i32
    %c0_i32_0 = arith.constant 0 : i32
    %c0_i32_1 = arith.constant 0 : i32
    return %c0_i32, %c0_i32_0 : i32, i32
  }
  func.func @transform_1(%arg0: i32, %arg1: i32, %arg2: memref<8xi32, #tpu.memory_space<smem>>, %arg3: memref<128xi32, #tpu.memory_space<smem>>, %arg4: memref<128xi32, #tpu.memory_space<smem>>) -> (i32, i32, i32) {
    %c0_i32 = arith.constant 0 : i32
    %c0_i32_0 = arith.constant 0 : i32
    return %arg1, %c0_i32, %arg0 : i32, i32, i32
  }
  func.func @transform_2(%arg0: i32, %arg1: i32, %arg2: memref<8xi32, #tpu.memory_space<smem>>, %arg3: memref<128xi32, #tpu.memory_space<smem>>, %arg4: memref<128xi32, #tpu.memory_space<smem>>) -> (i32, i32) {
    %c0_i32 = arith.constant 0 : i32
    %c0_i32_0 = arith.constant 0 : i32
    return %c0_i32, %arg0 : i32, i32
  }
  func.func @transform_3(%arg0: i32, %arg1: i32, %arg2: memref<8xi32, #tpu.memory_space<smem>>, %arg3: memref<128xi32, #tpu.memory_space<smem>>, %arg4: memref<128xi32, #tpu.memory_space<smem>>) -> (i32, i32) {
    %c0_i32 = arith.constant 0 : i32
    %c0_i32_0 = arith.constant 0 : i32
    return %c0_i32, %arg0 : i32, i32
  }
}

</mosaic_0001>

<llo_original>
// kernel: sparse_conv3d_forward.1
$region0: #{sparse_conv3d_forward.1}
  #allocation0 [shape = 'u32[]', space=smem, size = 0x4, offset = 0x4, fixed_abs, tag = 'smem constant byte address 0x4 - core index']
  #allocation1 [shape = 'u32[144,128]{1,0:T(1,128)}', space=vmem, size = 0x12000, scoped, tag = 'internal scratch']
  #allocation2 [shape = 'f32[16,128]{1,0:T(8,128)}', space=vmem, size = 0x2000, scoped, tag = 'scratch operand']
  #allocation3 [shape = 'f32[16,128]{1,0:T(8,128)}', space=vmem, size = 0x2000, scoped, tag = 'scratch operand']
  #allocation4 [shape = 's32[1]{0}', space=sflag, size = 0x4, scoped, tag = 'scoped memory for sparse_conv3d_forward.1']
  #allocation5 [shape = 'u8[512]{0}', space=smem, size = 0x200, scoped, tag = 'prefetched SMEM operand 0']
  #allocation6 [shape = 'u8[512]{0}', space=smem, size = 0x200, scoped, tag = 'prefetched SMEM operand 1']
  #allocation7 [shape = 'u8[512]{0}', space=smem, size = 0x200, scoped, tag = 'prefetched SMEM operand 2']
  %s0 = inlined_call_operand.vmem [shape: s32[8], index: 0, kind: input, shape index: {}]
  %s1 = inlined_call_operand.vmem [shape: s32[128], index: 1, kind: input, shape index: {}]
  %s2 = inlined_call_operand.vmem [shape: s32[128], index: 2, kind: input, shape index: {}]
  %s3 = inlined_call_operand.vmem [shape: f32[24,128], index: 3, kind: input, shape index: {}]
  %s4 = inlined_call_operand.vmem [shape: f32[8,128,128], index: 4, kind: input, shape index: {}]
  %s5 = inlined_call_operand.vmem [shape: f32[1,128], index: 5, kind: input, shape index: {}]
  %s6 = inlined_call_operand.vmem [shape: f32[24,128], index: 6, kind: output, shape index: {}]
  %s7 = sld [smem:[#allocation0]]
  $region71: #{sparse_conv3d_forward.1} parent=0
    _
  %s9 = ssub.s32 1, %s7
  %s10 = scalar_select 0, %s9, %s7
  %s11 = sshll.u32 %s0, 4
  %s12 = int_to_ptr.vmem [resolvable:$true] %s11
  %14 = dma.vmem_to_smem %s12, 16, [#allocation5], [#allocation4]
  %s15 = sshll.u32 %s1, 4
  %s16 = int_to_ptr.vmem [resolvable:$true] %s15
  %18 = dma.vmem_to_smem %s16, 16, [#allocation6], [#allocation4]
  %s19 = sshll.u32 %s2, 4
  %s20 = int_to_ptr.vmem [resolvable:$true] %s19
  %22 = dma.vmem_to_smem %s20, 16, [#allocation7], [#allocation4]
  %23 = dma.done [#allocation4], 48
  %24 = sfence
  loop: start=0, step=1, limit=10
  $region2: #{sparse_conv3d_forward.1} parent=0 // loop_pre_header
    _
  $region3: #{sparse_conv3d_forward.1} parent=0 // loop_header
    %s26 = sphi 0, %s30
    %p27 = scmp.ge.s32.totalorder %s26, 10
    %s33 = sphi 0, %s45
    %s34 = sphi 0, %s41
    %s35 = sphi 0, %s33
    %s36 = sphi 0, %s34
    %s37 = sphi 0, %s35
    %s38 = sphi 0, %s36
    %s46 = sphi 0, %s46
    %s48 = sphi 0, %s46
    %s49 = sphi 0, %s48
    %s63 = sphi 0, %s49
    %s71 = sphi 0, %s73
    %s74 = sphi 0, %s71
    %s75 = sphi 0, %s74
    %s91 = sphi 0, %s75
    %s97 = sphi 0, %s99
    %s100 = sphi 0, %s97
    %s101 = sphi 0, %s100
    %s117 = sphi 0, %s101
    %s123 = sphi 0, %s125
    %s126 = sphi 0, %s123
    %s127 = sphi 0, %s126
    %s143 = sphi 0, %s127
  $region4: #{sparse_conv3d_forward.1} parent=0 // loop_header_branch
    %29 = sbr.rel (%p27) target = $region8
  $region5: #{sparse_conv3d_forward.1} parent=0 // loop_body
    %s31 = ssub.s32 %s26, 1
    %s32 = ssub.s32 %s26, 2
    %s39 = sadd.s32 1, %s34
    %p40 = scmp.ge.s32.totalorder %s39, 8
    %s41 = scalar_select %p40, 0, %s39
    %s42 = sadd.s32 1, %s33
    %s43 = scalar_select %p40, %s42, %s33
    %p44 = scmp.ge.s32.totalorder %s43, 1
    %s45 = scalar_select %p44, 0, %s43
    %s47 = sadd.s32 %s46, 1
    %p50 = scmp.eq.s32.totalorder %s26, 7
    %p51 = scmp.ne.s32.totalorder %s46, %s48
    %p52 = scmp.eq.s32.totalorder %s26, 0
    %p53 = por %p51, %p52
    %p54 = scmp.ne.s32.totalorder %s46, %s48
    %p55 = scmp.eq.s32.totalorder %s31, 7
    %p56 = por %p54, %p55
    %p57 = scmp.ne.s32.totalorder %s48, %s49
    %p58 = scmp.eq.s32.totalorder %s31, 0
    %p59 = por %p57, %p58
    %p60 = scmp.ne.s32.totalorder %s48, %s49
    %p61 = scmp.eq.s32.totalorder %s32, 7
    %p62 = por %p60, %p61
    %p64 = scmp.ne.s32.totalorder %s49, %s63
    %p65 = scmp.eq.s32.totalorder %s32, 0
    %p66 = por %p64, %p65
    %s67 = ssub.s32 %s34, %s41
    %s68 = ssub.s32 %s33, %s45
    %s69 = sor.u32 %s67, %s68
    %p70 = scmp.eq.s32.totalorder %s69, 0
    %s72 = sadd.s32 %s71, 1
    %s73 = scalar_select %p70, %s71, %s72
    %p76 = pneg %p70
    %p77 = scmp.eq.s32.totalorder %s26, 7
    %p78 = por %p76, %p77
    %p79 = scmp.ne.s32.totalorder %s71, %s74
    %p80 = scmp.eq.s32.totalorder %s26, 0
    %p81 = por %p79, %p80
    %p82 = scmp.ne.s32.totalorder %s71, %s74
    %p83 = scmp.eq.s32.totalorder %s31, 7
    %p84 = por %p82, %p83
    %p85 = scmp.ne.s32.totalorder %s74, %s75
    %p86 = scmp.eq.s32.totalorder %s31, 0
    %p87 = por %p85, %p86
    %p88 = scmp.ne.s32.totalorder %s74, %s75
    %p89 = scmp.eq.s32.totalorder %s32, 7
    %p90 = por %p88, %p89
    %p92 = scmp.ne.s32.totalorder %s75, %s91
    %p93 = scmp.eq.s32.totalorder %s32, 0
    %p94 = por %p92, %p93
    %s95 = ssub.s32 %s33, %s45
    %p96 = scmp.eq.s32.totalorder %s95, 0
    %s98 = sadd.s32 %s97, 1
    %s99 = scalar_select %p96, %s97, %s98
    %p102 = pneg %p96
    %p103 = scmp.eq.s32.totalorder %s26, 7
    %p104 = por %p102, %p103
    %p105 = scmp.ne.s32.totalorder %s97, %s100
    %p106 = scmp.eq.s32.totalorder %s26, 0
    %p107 = por %p105, %p106
    %p108 = scmp.ne.s32.totalorder %s97, %s100
    %p109 = scmp.eq.s32.totalorder %s31, 7
    %p110 = por %p108, %p109
    %p111 = scmp.ne.s32.totalorder %s100, %s101
    %p112 = scmp.eq.s32.totalorder %s31, 0
    %p113 = por %p111, %p112
    %p114 = scmp.ne.s32.totalorder %s100, %s101
    %p115 = scmp.eq.s32.totalorder %s32, 7
    %p116 = por %p114, %p115
    %p118 = scmp.ne.s32.totalorder %s101, %s117
    %p119 = scmp.eq.s32.totalorder %s32, 0
    %p120 = por %p118, %p119
    %s121 = ssub.s32 %s33, %s45
    %p122 = scmp.eq.s32.totalorder %s121, 0
    %s124 = sadd.s32 %s123, 1
    %s125 = scalar_select %p122, %s123, %s124
    %p128 = pneg %p122
    %p129 = scmp.eq.s32.totalorder %s26, 7
    %p130 = por %p128, %p129
    %p131 = scmp.ne.s32.totalorder %s123, %s126
    %p132 = scmp.eq.s32.totalorder %s26, 0
    %p133 = por %p131, %p132
    %p134 = scmp.ne.s32.totalorder %s123, %s126
    %p135 = scmp.eq.s32.totalorder %s31, 7
    %p136 = por %p134, %p135
    %p137 = scmp.ne.s32.totalorder %s126, %s127
    %p138 = scmp.eq.s32.totalorder %s31, 0
    %p139 = por %p137, %p138
    %p140 = scmp.ne.s32.totalorder %s126, %s127
    %p141 = scmp.eq.s32.totalorder %s32, 7
    %p142 = por %p140, %p141
    %p144 = scmp.ne.s32.totalorder %s127, %s143
    %p145 = scmp.eq.s32.totalorder %s32, 0
    %p146 = por %p144, %p145
    %p147 = scmp.le.s32.totalorder 1, %s26
    %p148 = scmp.lt.s32.totalorder %s26, 9
    %p149 = pnand %p147, %p148
    %p150 = pneg %p149
    // Predicated region
    $region9: #{sparse_conv3d_forward.1} parent=5 // pred_check
      _
    $region10: #{sparse_conv3d_forward.1} parent=5 // pred_check_branch
      %152 = sbr.rel (%p149) target = $region12
    $region11: #{sparse_conv3d_forward.1} parent=5 // pred_region
      %s153 = ssub.s32 %s26, 1
      // Predicated region
      $region13: #{sparse_conv3d_forward.1} parent=11 // pred_check
        %p154 = pneg %p59
      $region14: #{sparse_conv3d_forward.1} parent=11 // pred_check_branch
        %156 = sbr.rel (%p154) target = $region16
      $region15: #{sparse_conv3d_forward.1} parent=11 // pred_region
        _
      $region16: #{sparse_conv3d_forward.1} parent=11 // pred_fallthru
        _
      // Predicated region
      $region17: #{sparse_conv3d_forward.1} parent=11 // pred_check
        %p157 = pneg %p113
      $region18: #{sparse_conv3d_forward.1} parent=11 // pred_check_branch
        %159 = sbr.rel (%p157) target = $region20
      $region19: #{sparse_conv3d_forward.1} parent=11 // pred_region
        %p160 = scmp.lt.s32.totalorder %s35, 0
        %s161 = scalar_select %p160, %s35, 0
        %s162 = scalar_lea.vmem %s5, %s161
      $region20: #{sparse_conv3d_forward.1} parent=11 // pred_fallthru
        _
    $region12: #{sparse_conv3d_forward.1} parent=5 // pred_fallthru
      _
    %p163 = scmp.lt.s32.totalorder %s26, 8
    // Predicated region
    $region21: #{sparse_conv3d_forward.1} parent=5 // pred_check
      %p164 = pneg %p163
    $region22: #{sparse_conv3d_forward.1} parent=5 // pred_check_branch
      %166 = sbr.rel (%p164) target = $region24
    $region23: #{sparse_conv3d_forward.1} parent=5 // pred_region
      // Predicated region
      $region25: #{sparse_conv3d_forward.1} parent=23 // pred_check
        %p167 = pneg %p81
      $region26: #{sparse_conv3d_forward.1} parent=23 // pred_check_branch
        %169 = sbr.rel (%p167) target = $region28
      $region27: #{sparse_conv3d_forward.1} parent=23 // pred_region
        %p170 = scmp.lt.s32.totalorder %s34, 7
        %s171 = scalar_select %p170, %s34, 7
        %p172 = scmp.lt.s32.totalorder %s33, 0
        %s173 = scalar_select %p172, %s33, 0
        %s174 = smul.addr %s171, 16
        %s175 = sadd.s32 %s173, %s174
        %s176 = smul.addr %s175, 8
        %s177 = scalar_lea.vmem %s4, %s176
      $region28: #{sparse_conv3d_forward.1} parent=23 // pred_fallthru
        _
    $region24: #{sparse_conv3d_forward.1} parent=5 // pred_fallthru
      _
    %p178 = scmp.le.s32.totalorder 1, %s26
    %p179 = scmp.lt.s32.totalorder %s26, 9
    %p180 = pnand %p178, %p179
    %p181 = pneg %p180
    // Predicated region
    $region29: #{sparse_conv3d_forward.1} parent=5 // pred_check
      _
    $region30: #{sparse_conv3d_forward.1} parent=5 // pred_check_branch
      %183 = sbr.rel (%p180) target = $region32
    $region31: #{sparse_conv3d_forward.1} parent=5 // pred_region
      %s184 = ssub.s32 %s26, 1
      %p185 = pneg %p59
      %p186 = pneg %p56
      %p187 = scmp.lt.s32.totalorder %s36, 7
      %s188 = scalar_select %p187, %s36, 7
      %p189 = scmp.lt.s32.totalorder %s35, 0
      %s190 = scalar_select %p189, %s35, 0
      %s191 = smul.addr %s188, 16
      %s192 = sadd.s32 %s190, %s191
      %s193 = smul.addr %s192, 8
      %s194 = scalar_lea.vmem %s4, %s193
      %p195 = pneg %p87
      %p196 = pneg %p84
      %p197 = scmp.lt.s32.totalorder %s35, 0
      %s198 = scalar_select %p197, %s35, 0
      %s199 = scalar_lea.vmem %s5, %s198
      %p200 = pneg %p113
      %p201 = pneg %p110
      %p202 = pneg %p139
      %p203 = pneg %p136
      %p204 = scmp.lt.s32.totalorder %s35, 0
      %s205 = scalar_select %p204, %s35, 0
      %s206 = smul.addr %s205, 8
      %s207 = scalar_lea.vmem %s6, %s206
      %p208 = scmp.lt.s32.totalorder %s36, 7
      %s209 = scalar_select %p208, %s36, 7
      %p210 = scmp.lt.s32.totalorder %s35, 0
      %s211 = scalar_select %p210, %s35, 0
      %s212 = smul.addr %s209, 16
      %s213 = sadd.s32 %s211, %s212
      %s214 = smul.addr %s213, 8
      %s215 = scalar_lea.vmem %s4, %s214
      %p216 = scmp.lt.s32.totalorder %s35, 0
      %s217 = scalar_select %p216, %s35, 0
      %s218 = scalar_lea.vmem %s5, %s217
      %p219 = scmp.lt.s32.totalorder %s35, 0
      %s220 = scalar_select %p219, %s35, 0
      %s221 = smul.addr %s220, 8
      %s222 = scalar_lea.vmem %s6, %s221
      %p223 = scmp.eq.s32.totalorder %s36, 0
      // Predicated region
      $region33: #{sparse_conv3d_forward.1} parent=31 // pred_check
        %p224 = pneg %p223
      $region34: #{sparse_conv3d_forward.1} parent=31 // pred_check_branch
        %226 = sbr.rel (%p224) target = $region36
      $region35: #{sparse_conv3d_forward.1} parent=31 // pred_region
        %227 = vst [vmem:[%s222] sm:$0xff] 0.0
        %228 = vst [vmem:[%s222 + $0x8] sm:$0xff] 0.0
        %229 = vst [vmem:[%s222 + $0x10] sm:$0xff] 0.0
      $region36: #{sparse_conv3d_forward.1} parent=31 // pred_fallthru
        _
      %s230 = sld [smem:[#allocation5 + %s36]]
      %p231 = scmp.gt.s32.totalorder %s230, 0
      // Predicated region
      $region37: #{sparse_conv3d_forward.1} parent=31 // pred_check
        %p232 = pneg %p231
      $region38: #{sparse_conv3d_forward.1} parent=31 // pred_check_branch
        %234 = sbr.rel (%p232) target = $region40
      $region39: #{sparse_conv3d_forward.1} parent=31 // pred_region
        %s235 = smul.u32 %s36, 16
        // While loop
        $region41: #{sparse_conv3d_forward.1} parent=39 // loop_pre_header
          _
        $region42: #{sparse_conv3d_forward.1} parent=39 // loop_header
          %s237 = sphi 0, %s239
          %p238 = scmp.ge.s32.totalorder %s237, %s230
        $region43: #{sparse_conv3d_forward.1} parent=39 // loop_header_branch
          %241 = sbr.rel (%p238) target = $region47
        $region44: #{sparse_conv3d_forward.1} parent=39 // loop_body
          %s242 = sadd.s32 %s235, %s237
          %s243 = sld [smem:[#allocation6 + %s242]]
          %s244 = scalar_lea.vmem %s3, %s243
          %v245 = vld [vmem:[%s244] sm:$0x1]
          %s246 = scalar_lea.vmem [#allocation2], %s237
          %247 = vst [vmem:[%s246] sm:$0x1] %v245
        $region45: #{sparse_conv3d_forward.1} parent=39 // loop_footer
          %s239 = sadd.s32 %s237, 1
        $region46: #{sparse_conv3d_forward.1} parent=39 // loop_footer_branch
          %236 = sbr.rel target = $region42
        $region47: #{sparse_conv3d_forward.1} parent=39 // loop_exit
          _
        %v248 = vld [vmem:[#allocation2] sm:$0xff]
        %v249 = vld [vmem:[#allocation2 + $0x8] sm:$0xff]
        %v250 = vld [vmem:[%s215] sm:$0xff]
        %v251 = vld [vmem:[%s215 + $0x8] sm:$0xff]
        %v252 = vld [vmem:[%s215 + $0x10] sm:$0xff]
        %v253 = vld [vmem:[%s215 + $0x18] sm:$0xff]
        %v254 = vld [vmem:[%s215 + $0x20] sm:$0xff]
        %v255 = vld [vmem:[%s215 + $0x28] sm:$0xff]
        %v256 = vld [vmem:[%s215 + $0x30] sm:$0xff]
        %v257 = vld [vmem:[%s215 + $0x38] sm:$0xff]
        %v258 = vld [vmem:[%s215 + $0x40] sm:$0xff]
        %v259 = vld [vmem:[%s215 + $0x48] sm:$0xff]
        %v260 = vld [vmem:[%s215 + $0x50] sm:$0xff]
        %v261 = vld [vmem:[%s215 + $0x58] sm:$0xff]
        %v262 = vld [vmem:[%s215 + $0x60] sm:$0xff]
        %v263 = vld [vmem:[%s215 + $0x68] sm:$0xff]
        %v264 = vld [vmem:[%s215 + $0x70] sm:$0xff]
        %v265 = vld [vmem:[%s215 + $0x78] sm:$0xff]
        %266 = vmatprep.subr.mxu0 0.0
        %267 = vmatpush1.msra.mxu0 %v250
        %268 = vmatprep.subr.mxu0 0.0
        %269 = vmatpush1.msra.mxu0 %v251
        %270 = vmatprep.subr.mxu0 0.0
        %271 = vmatpush1.msra.mxu0 %v252
        %272 = vmatprep.subr.mxu0 0.0
        %273 = vmatpush1.msra.mxu0 %v253
        %274 = vmatprep.subr.mxu0 0.0
        %275 = vmatpush1.msra.mxu0 %v254
        %276 = vmatprep.subr.mxu0 0.0
        %277 = vmatpush1.msra.mxu0 %v255
        %278 = vmatprep.subr.mxu0 0.0
        %279 = vmatpush1.msra.mxu0 %v256
        %280 = vmatprep.subr.mxu0 0.0
        %281 = vmatpush1.msra.mxu0 %v257
        %282 = vmatprep.subr.mxu0 0.0
        %283 = vmatpush1.msra.mxu0 %v258
        %284 = vmatprep.subr.mxu0 0.0
        %285 = vmatpush1.msra.mxu0 %v259
        %286 = vmatprep.subr.mxu0 0.0
        %287 = vmatpush1.msra.mxu0 %v260
        %288 = vmatprep.subr.mxu0 0.0
        %289 = vmatpush1.msra.mxu0 %v261
        %290 = vmatprep.subr.mxu0 0.0
        %291 = vmatpush1.msra.mxu0 %v262
        %292 = vmatprep.subr.mxu0 0.0
        %293 = vmatpush1.msra.mxu0 %v263
        %294 = vmatprep.subr.mxu0 0.0
        %295 = vmatpush1.msra.mxu0 %v264
        %296 = vmatprep.subr.mxu0 0.0
        %297 = vmatpush1.msra.mxu0 %v265
        %298 = vmatprep.subr.mxu0 0.0
        %299 = vmatpush1.msra.mxu0 0.0
        %300 = vmatprep.subr.mxu0 0.0
        %301 = vmatpush1.msra.mxu0 0.0
        %302 = vmatprep.subr.mxu0 0.0
        %303 = vmatpush1.msra.mxu0 0.0
        %304 = vmatprep.subr.mxu0 0.0
        %305 = vmatpush1.msra.mxu0 0.0
        %306 = vmatprep.subr.mxu0 0.0
        %307 = vmatpush1.msra.mxu0 0.0
        %308 = vmatprep.subr.mxu0 0.0
        %309 = vmatpush1.msra.mxu0 0.0
        %310 = vmatprep.subr.mxu0 0.0
        %311 = vmatpush1.msra.mxu0 0.0
        %312 = vmatprep.subr.mxu0 0.0
        %313 = vmatpush1.msra.mxu0 0.0
        %314 = vmatprep.subr.mxu0 0.0
        %315 = vmatpush1.msra.mxu0 0.0
        %316 = vmatprep.subr.mxu0 0.0
        %317 = vmatpush1.msra.mxu0 0.0
        %318 = vmatprep.subr.mxu0 0.0
        %319 = vmatpush1.msra.mxu0 0.0
        %320 = vmatprep.subr.mxu0 0.0
        %321 = vmatpush1.msra.mxu0 0.0
        %322 = vmatprep.subr.mxu0 0.0
        %323 = vmatpush1.msra.mxu0 0.0
        %324 = vmatprep.subr.mxu0 0.0
        %325 = vmatpush1.msra.mxu0 0.0
        %326 = vmatprep.subr.mxu0 0.0
        %327 = vmatpush1.msra.mxu0 0.0
        %328 = vmatprep.subr.mxu0 0.0
        %329 = vmatpush1.msra.mxu0 0.0
        %330 = vmatprep.mubr.f32.mxu0 0.0
        %331 = vmatmul.mubr.f32.gmra.mrb[0].mxu0 %v248
        %v332 = vpop.f32.mrb[0].mxu0
        %v333 = vadd.f32 0.0, %v332
        %v334 = vpop.f32.mrb[0].mxu0
        %335 = vmatprep.mubr.f32.mxu0 0.0
        %336 = vmatmul.mubr.f32.gmra.mrb[0].mxu0 %v249
        %v337 = vpop.f32.mrb[0].mxu0
        %v338 = vadd.f32 0.0, %v337
        %v339 = vpop.f32.mrb[0].mxu0
        %340 = vdwg.mxu0
        %341 = vst [vmem:[#allocation3] sm:$0xff] %v333
        %342 = vst [vmem:[#allocation3 + $0x8] sm:$0xff] %v338
        // While loop
        $region48: #{sparse_conv3d_forward.1} parent=39 // loop_pre_header
          _
        $region49: #{sparse_conv3d_forward.1} parent=39 // loop_header
          %s344 = sphi 0, %s346
          %p345 = scmp.ge.s32.totalorder %s344, %s230
        $region50: #{sparse_conv3d_forward.1} parent=39 // loop_header_branch
          %348 = sbr.rel (%p345) target = $region54
        $region51: #{sparse_conv3d_forward.1} parent=39 // loop_body
          %s349 = sadd.s32 %s235, %s344
          %s350 = sld [smem:[#allocation7 + %s349]]
          %s351 = scalar_lea.vmem %s222, %s350
          %v352 = vld [vmem:[%s351] sm:$0x1]
          %s353 = scalar_lea.vmem [#allocation3], %s344
          %v354 = vld [vmem:[%s353] sm:$0x1]
          %v355 = vadd.f32 %v352, %v354
          %356 = vst [vmem:[%s351] sm:$0x1] %v355
        $region52: #{sparse_conv3d_forward.1} parent=39 // loop_footer
          %s346 = sadd.s32 %s344, 1
        $region53: #{sparse_conv3d_forward.1} parent=39 // loop_footer_branch
          %343 = sbr.rel target = $region49
        $region54: #{sparse_conv3d_forward.1} parent=39 // loop_exit
          _
      $region40: #{sparse_conv3d_forward.1} parent=31 // pred_fallthru
        _
      %p357 = scmp.eq.s32.totalorder %s36, 7
      // Predicated region
      $region55: #{sparse_conv3d_forward.1} parent=31 // pred_check
        %p358 = pneg %p357
      $region56: #{sparse_conv3d_forward.1} parent=31 // pred_check_branch
        %360 = sbr.rel (%p358) target = $region58
      $region57: #{sparse_conv3d_forward.1} parent=31 // pred_region
        %v361 = vld [vmem:[%s222] sm:$0xff]
        %v362 = vld [vmem:[%s222 + $0x8] sm:$0xff]
        %v363 = vld [vmem:[%s222 + $0x10] sm:$0xff]
        %v364 = vld [vmem:[%s218] sm:$0x1]
        %v366 = vlaneseq
        %v367 = vshrl.u32 %v366, 7
        %v368 = vsub.s32 0, %v367
        %v369 = vrot.slane %v364, %v368
        %v371 = vadd.f32 %v361, %v369
        %v372 = vadd.f32 %v362, %v369
        %v373 = vadd.f32 %v363, %v369
        %374 = vst [vmem:[%s222] sm:$0xff] %v371
        %375 = vst [vmem:[%s222 + $0x8] sm:$0xff] %v372
        %376 = vst [vmem:[%s222 + $0x10] sm:$0xff] %v373
      $region58: #{sparse_conv3d_forward.1} parent=31 // pred_fallthru
        _
      %p377 = scmp.lt.s32.totalorder %s35, 0
      %s378 = scalar_select %p377, %s35, 0
      %s379 = smul.addr %s378, 8
      %s380 = scalar_lea.vmem %s6, %s379
      // Predicated region
      $region59: #{sparse_conv3d_forward.1} parent=31 // pred_check
        %p381 = pneg %p136
      $region60: #{sparse_conv3d_forward.1} parent=31 // pred_check_branch
        %383 = sbr.rel (%p381) target = $region62
      $region61: #{sparse_conv3d_forward.1} parent=31 // pred_region
        _
      $region62: #{sparse_conv3d_forward.1} parent=31 // pred_fallthru
        _
      // Predicated region
      $region63: #{sparse_conv3d_forward.1} parent=31 // pred_check
        %p384 = pneg %p136
      $region64: #{sparse_conv3d_forward.1} parent=31 // pred_check_branch
        %386 = sbr.rel (%p384) target = $region66
      $region65: #{sparse_conv3d_forward.1} parent=31 // pred_region
        %p387 = scmp.lt.s32.totalorder %s35, 0
        %s388 = scalar_select %p387, %s35, 0
        %s389 = smul.addr %s388, 8
        %s390 = scalar_lea.vmem %s6, %s389
      $region66: #{sparse_conv3d_forward.1} parent=31 // pred_fallthru
        _
    $region32: #{sparse_conv3d_forward.1} parent=5 // pred_fallthru
      _
    %p391 = scmp.le.s32.totalorder 2, %s26
    // Predicated region
    $region67: #{sparse_conv3d_forward.1} parent=5 // pred_check
      %p392 = pneg %p391
    $region68: #{sparse_conv3d_forward.1} parent=5 // pred_check_branch
      %394 = sbr.rel (%p392) target = $region70
    $region69: #{sparse_conv3d_forward.1} parent=5 // pred_region
      %s395 = ssub.s32 %s26, 2
    $region70: #{sparse_conv3d_forward.1} parent=5 // pred_fallthru
      _
  $region6: #{sparse_conv3d_forward.1} parent=0 // loop_footer
    %s30 = sadd.s32 1, %s26
  $region7: #{sparse_conv3d_forward.1} parent=0 // loop_footer_branch
    %25 = sbr.rel target = $region3
  $region8: #{sparse_conv3d_forward.1} parent=0 // loop_exit
    _

</llo_original>
